<compile_context>
chip_gen: v7x
topology: tpu7x:2x2x1
jax: 0.10.0
libtpu: 0.0.40
codegen_flags: <defaults>
</compile_context>

<pallas_src>
import functools

import jax
import jax.numpy as jnp
from jax.experimental import pallas as pl
from jax.experimental.pallas import tpu as pltpu


def pinn_kernel(xin_ref, w_in_ref, b_in_ref, w_mid_ref, b_mid_ref,
                w_out_ref, b_out_ref, out_ref, *,
                num_middle, n_chunks, bf16_elem):
    """Fused MLP forward, batch in lanes.

    xin_ref:  (2, tm)   f32   rows = [x, t], lanes = batch
    w_in_ref: (D, 2)    f32   PyTorch (out, in) layout (input layer runs on the VPU)
    b_in_ref: (D, 1)    f32
    w_mid_ref:(L, D, D) bf16
    b_mid_ref:(L, D, 1) f32
    w_out_ref:(1, D)    bf16
    b_out_ref:(1, 1)    f32
    out_ref:  (1, tm)   f32   lane-dense output block
    """
    tm = out_ref.shape[-1]
    tc = tm // n_chunks

    # Hoisted loads (constant across chunks / layers).
    w0 = w_in_ref[:, 0:1]                      # (D, 1) f32
    w1 = w_in_ref[:, 1:2]                      # (D, 1) f32
    b0 = b_in_ref[...]                         # (D, 1) f32
    w_out = w_out_ref[...]                     # (1, D) bf16
    b_out = b_out_ref[...]                     # (1, 1) f32

    def act(pre):                              # pre: (D, tc) f32
        if bf16_elem:                          # v6e / v7x: bf16 VPU + EUP
            return jnp.tanh(pre.astype(jnp.bfloat16))
        return jnp.tanh(pre)                   # v5e: f32 elementwise

    def as_mxu(h):
        return h if h.dtype == jnp.bfloat16 else h.astype(jnp.bfloat16)

    # ---- input layer: K=2 contraction done on the VPU as broadcast FMAs (f32 inputs) ----
    hs = []
    for c in range(n_chunks):
        xc = xin_ref[:, c * tc:(c + 1) * tc]   # (2, tc) f32
        pre = w0 * xc[0:1, :] + w1 * xc[1:2, :] + b0   # (D, tc) f32
        hs.append(act(pre))

    # ---- middle layers: independent lane sub-chains interleaved per layer (MXU/EUP overlap) ----
    for l in range(num_middle):                # static unroll
        w_l = w_mid_ref[l]                     # (D, D) bf16
        b_l = b_mid_ref[l]                     # (D, 1) f32
        for c in range(n_chunks):
            z = jnp.dot(w_l, as_mxu(hs[c]), preferred_element_type=jnp.float32)
            hs[c] = act(z + b_l)

    # ---- output layer ----
    for c in range(n_chunks):
        o = jnp.dot(w_out, as_mxu(hs[c]), preferred_element_type=jnp.float32)  # (1, tc)
        out_ref[:, c * tc:(c + 1) * tc] = (o + b_out).astype(out_ref.dtype)


def init_pinn_params(key, num_hidden, dim_hidden):
    """PyTorch-style Linear init (uniform +-1/sqrt(fan_in)); weights stored (out, in),
    biases stored as (out, 1) columns so the kernel can do W @ h + b directly."""
    num_middle = num_hidden - 1
    D = dim_hidden
    keys = jax.random.split(key, 4 + 2 * max(num_middle, 0))

    def uinit(k, shape, fan_in):
        bound = 1.0 / jnp.sqrt(jnp.float32(fan_in))
        return jax.random.uniform(k, shape, jnp.float32, -bound, bound)

    w_in = uinit(keys[0], (D, 2), 2)
    b_in = uinit(keys[1], (D, 1), 2)
    if num_middle > 0:
        w_mid = jnp.stack([uinit(keys[2 + 2 * i], (D, D), D) for i in range(num_middle)])
        b_mid = jnp.stack([uinit(keys[3 + 2 * i], (D, 1), D) for i in range(num_middle)])
    else:
        w_mid = jnp.zeros((0, D, D), jnp.float32)
        b_mid = jnp.zeros((0, D, 1), jnp.float32)
    w_out = uinit(keys[2 + 2 * num_middle], (1, D), D)
    b_out = uinit(keys[3 + 2 * num_middle], (1, 1), D)
    return dict(w_in=w_in, b_in=b_in, w_mid=w_mid, b_mid=b_mid,
                w_out=w_out, b_out=b_out)


def _device_kind():
    try:
        return jax.devices()[0].device_kind.lower()
    except Exception:
        return ""


def pinn_forward(x, t, params, *, tm=1024):
    # torch.cat([x, t], dim=1) -> (N, 2), then transpose to batch-in-lanes (2, N_pad)
    x_stack = jnp.concatenate([x, t], axis=1).astype(jnp.float32)
    N = x_stack.shape[0]
    D = params["w_in"].shape[0]
    num_middle = params["w_mid"].shape[0]

    kind = _device_kind()
    bf16_elem = any(s in kind for s in ("v6", "v7", "7x"))          # bf16 VPU/EUP available
    multi_tc = any(s in kind for s in ("v7", "7x", "v4", "v5p"))    # >1 TC per chip

    # Lane tile: multiple of 128, at most tm, shrunk for tiny N; on multi-TC chips cap it
    # so the grid has >=2 steps when N > 128 (so both cores get work).
    tm_req = tm
    if multi_tc and N > 128:
        half_rounded = (((N + 1) // 2 + 127) // 128) * 128
        tm_req = min(tm_req, half_rounded)
    tm_eff = max(128, min(tm_req, ((N + 127) // 128) * 128))
    n_total = ((N + tm_eff - 1) // tm_eff) * tm_eff
    grid = (n_total // tm_eff,)
    n_chunks = 2 if tm_eff % 256 == 0 else 1

    x_T = jnp.zeros((2, n_total), jnp.float32).at[:, :N].set(x_stack.T)

    # Input layer stays f32 (VPU); middle/output matmul operands in bf16, f32 accumulation.
    w_in = params["w_in"].astype(jnp.float32)
    w_out = params["w_out"].astype(jnp.bfloat16)
    if num_middle > 0:
        w_mid = params["w_mid"].astype(jnp.bfloat16)
        b_mid = params["b_mid"]
    else:  # keep a uniform kernel signature with a dummy (unused) layer slab
        w_mid = jnp.zeros((1, D, D), jnp.bfloat16)
        b_mid = jnp.zeros((1, D, 1), jnp.float32)
    nm_blk = max(num_middle, 1)

    kernel = functools.partial(pinn_kernel, num_middle=num_middle,
                               n_chunks=n_chunks, bf16_elem=bf16_elem)

    flops = 2 * n_total * (2 * D + num_middle * D * D + D)
    transcendentals = n_total * D * (1 + num_middle)
    bytes_accessed = (x_T.size * 4 + n_total * 4
                      + w_in.size * 4 + w_mid.size * 2 + w_out.size * 2
                      + params["b_in"].size * 4 + b_mid.size * 4
                      + params["b_out"].size * 4)

    out_T = pl.pallas_call(
        kernel,
        out_shape=jax.ShapeDtypeStruct((1, n_total), jnp.float32),
        grid_spec=pl.GridSpec(
            grid=grid,
            in_specs=[
                pl.BlockSpec((2, tm_eff), lambda i: (0, i)),          # x tile (lanes = batch)
                pl.BlockSpec((D, 2), lambda i: (0, 0)),               # w_in (f32, VPU path)
                pl.BlockSpec((D, 1), lambda i: (0, 0)),               # b_in
                pl.BlockSpec((nm_blk, D, D), lambda i: (0, 0, 0)),    # w_mid (whole, in VMEM)
                pl.BlockSpec((nm_blk, D, 1), lambda i: (0, 0, 0)),    # b_mid
                pl.BlockSpec((1, D), lambda i: (0, 0)),               # w_out
                pl.BlockSpec((1, 1), lambda i: (0, 0)),               # b_out
            ],
            out_specs=pl.BlockSpec((1, tm_eff), lambda i: (0, i)),    # lane-dense output
        ),
        compiler_params=pltpu.CompilerParams(
            dimension_semantics=("parallel",),                        # shards grid across TCs
        ),
        cost_estimate=pl.CostEstimate(
            flops=flops, transcendentals=transcendentals,
            bytes_accessed=bytes_accessed),
    )(x_T, w_in, params["b_in"], w_mid, b_mid, w_out, params["b_out"])

    return out_T[:, :N].T                                             # back to (N, 1)


def pinn_reference(x, t, params):
    """Pure-JAX f32 reference of the same forward pass (PyTorch semantics)."""
    h = jnp.concatenate([x, t], axis=1)
    h = jnp.tanh(h @ params["w_in"].T + params["b_in"].T)
    for l in range(params["w_mid"].shape[0]):
        h = jnp.tanh(h @ params["w_mid"][l].T + params["b_mid"][l].T)
    return h @ params["w_out"].T + params["b_out"].T


if __name__ == "__main__":
    num_hidden = 3      # -> 2 middle layers, like PINN(num_hidden=3, dim_hidden=32)
    dim_hidden = 32

    key = jax.random.PRNGKey(0)
    kx, kt, kp = jax.random.split(key, 3)
    params = init_pinn_params(kp, num_hidden, dim_hidden)

    # Two batch sizes: tiny (single 128-lane tile, 1 chunk) and larger
    # (exercises the 2-sub-chunk interleave and, on multi-TC chips, >=2 grid steps).
    for N in (16, 512):
        kxn, ktn = jax.random.split(jax.random.fold_in(kx, N))
        x = jax.random.uniform(kxn, (N, 1), jnp.float32, -1.0, 1.0)
        t = jax.random.uniform(ktn, (N, 1), jnp.float32, 0.0, 1.0)

        out = jax.block_until_ready(pinn_forward(x, t, params))
        ref = pinn_reference(x, t, params)

        assert out.shape == (N, 1)
        # bf16 matmul operands (and bf16 tanh on v6e/v7x) vs. f32 reference -> loose tolerance
        err = float(jnp.max(jnp.abs(out - ref)))
        assert jnp.allclose(out, ref, atol=3e-2, rtol=3e-2), err

    print("KERNEL_OK")
</pallas_src>

<mosaic_0001>
module attributes {stable_mosaic.version = 11 : i64} {
  func.func @pinn_kernel(%arg0: i32, %arg1: memref<2x128xf32, #tpu.memory_space<vmem>>, %arg2: memref<32x2xf32, #tpu.memory_space<vmem>>, %arg3: memref<32x1xf32, #tpu.memory_space<vmem>>, %arg4: memref<2x32x32xbf16, #tpu.memory_space<vmem>>, %arg5: memref<2x32x1xf32, #tpu.memory_space<vmem>>, %arg6: memref<1x32xbf16, #tpu.memory_space<vmem>>, %arg7: memref<1x1xf32, #tpu.memory_space<vmem>>, %arg8: memref<1x128xf32, #tpu.memory_space<vmem>>) attributes {dimension_semantics = [#tpu.dimension_semantics<parallel>], iteration_bounds = array<i64: 1>, scalar_prefetch = 0 : i64, scratch_operands = 0 : i64, tpu.core_type = #tpu.core_type<tc>, window_params = [{transform_indices = @transform_0, window_bounds = array<i64: 2, 128>}, {pipeline_mode = #tpu.pipeline_mode<synchronous>, transform_indices = @transform_1, window_bounds = array<i64: 32, 2>}, {pipeline_mode = #tpu.pipeline_mode<synchronous>, transform_indices = @transform_2, window_bounds = array<i64: 32, 1>}, {pipeline_mode = #tpu.pipeline_mode<synchronous>, transform_indices = @transform_3, window_bounds = array<i64: 2, 32, 32>}, {pipeline_mode = #tpu.pipeline_mode<synchronous>, transform_indices = @transform_4, window_bounds = array<i64: 2, 32, 1>}, {pipeline_mode = #tpu.pipeline_mode<synchronous>, transform_indices = @transform_5, window_bounds = array<i64: 1, 32>}, {pipeline_mode = #tpu.pipeline_mode<synchronous>, transform_indices = @transform_6, window_bounds = array<i64: 1, 1>}, {transform_indices = @transform_7, window_bounds = array<i64: 1, 128>}]} {
    %c0 = arith.constant 0 : index
    %c0_0 = arith.constant 0 : index
    %0 = vector.load %arg2[%c0, %c0_0] : memref<32x2xf32, #tpu.memory_space<vmem>>, vector<32x1xf32>
    %c0_1 = arith.constant 0 : index
    %c1 = arith.constant 1 : index
    %1 = vector.load %arg2[%c0_1, %c1] : memref<32x2xf32, #tpu.memory_space<vmem>>, vector<32x1xf32>
    %c0_2 = arith.constant 0 : index
    %c0_3 = arith.constant 0 : index
    %2 = vector.load %arg3[%c0_2, %c0_3] : memref<32x1xf32, #tpu.memory_space<vmem>>, vector<32x1xf32>
    %c0_4 = arith.constant 0 : index
    %c0_5 = arith.constant 0 : index
    %3 = vector.load %arg6[%c0_4, %c0_5] : memref<1x32xbf16, #tpu.memory_space<vmem>>, vector<1x32xbf16>
    %c0_6 = arith.constant 0 : index
    %c0_7 = arith.constant 0 : index
    %4 = vector.load %arg7[%c0_6, %c0_7] : memref<1x1xf32, #tpu.memory_space<vmem>>, vector<1x1xf32>
    %c0_8 = arith.constant 0 : index
    %c0_9 = arith.constant 0 : index
    %5 = vector.load %arg1[%c0_8, %c0_9] : memref<2x128xf32, #tpu.memory_space<vmem>>, vector<2x128xf32>
    %6 = vector.extract_strided_slice %5 {offsets = [0, 0], sizes = [1, 128], strides = [1, 1]} : vector<2x128xf32> to vector<1x128xf32>
    %7 = vector.broadcast %0 : vector<32x1xf32> to vector<32x128xf32>
    %8 = vector.broadcast %6 : vector<1x128xf32> to vector<32x128xf32>
    %9 = arith.mulf %7, %8 : vector<32x128xf32>
    %10 = vector.extract_strided_slice %5 {offsets = [1, 0], sizes = [1, 128], strides = [1, 1]} : vector<2x128xf32> to vector<1x128xf32>
    %11 = vector.broadcast %1 : vector<32x1xf32> to vector<32x128xf32>
    %12 = vector.broadcast %10 : vector<1x128xf32> to vector<32x128xf32>
    %13 = arith.mulf %11, %12 : vector<32x128xf32>
    %14 = arith.addf %9, %13 : vector<32x128xf32>
    %15 = vector.broadcast %2 : vector<32x1xf32> to vector<32x128xf32>
    %16 = arith.addf %14, %15 : vector<32x128xf32>
    %17 = math.tanh %16 : vector<32x128xf32>
    %c0_10 = arith.constant 0 : index
    %c0_11 = arith.constant 0 : index
    %c0_12 = arith.constant 0 : index
    %18 = vector.load %arg4[%c0_10, %c0_11, %c0_12] : memref<2x32x32xbf16, #tpu.memory_space<vmem>>, vector<1x32x32xbf16>
    %19 = vector.shape_cast %18 : vector<1x32x32xbf16> to vector<32x32xbf16>
    %c0_13 = arith.constant 0 : index
    %c0_14 = arith.constant 0 : index
    %c0_15 = arith.constant 0 : index
    %20 = vector.load %arg5[%c0_13, %c0_14, %c0_15] : memref<2x32x1xf32, #tpu.memory_space<vmem>>, vector<1x32x1xf32>
    %21 = vector.shape_cast %20 : vector<1x32x1xf32> to vector<32x1xf32>
    %22 = arith.truncf %17 : vector<32x128xf32> to vector<32x128xbf16>
    %cst = arith.constant dense<0.000000e+00> : vector<32x128xf32>
    %23 = tpu.matmul %19, %22, %cst {dimension_numbers = #tpu.dot_dimension_numbers<[1], [0], [0], [1], [0, 0, 1, 1], [], []>} : vector<32x32xbf16>, vector<32x128xbf16>, vector<32x128xf32> -> vector<32x128xf32>
    %24 = vector.broadcast %21 : vector<32x1xf32> to vector<32x128xf32>
    %25 = arith.addf %23, %24 : vector<32x128xf32>
    %26 = math.tanh %25 : vector<32x128xf32>
    %c1_16 = arith.constant 1 : index
    %c0_17 = arith.constant 0 : index
    %c0_18 = arith.constant 0 : index
    %27 = vector.load %arg4[%c1_16, %c0_17, %c0_18] : memref<2x32x32xbf16, #tpu.memory_space<vmem>>, vector<1x32x32xbf16>
    %28 = vector.shape_cast %27 : vector<1x32x32xbf16> to vector<32x32xbf16>
    %c1_19 = arith.constant 1 : index
    %c0_20 = arith.constant 0 : index
    %c0_21 = arith.constant 0 : index
    %29 = vector.load %arg5[%c1_19, %c0_20, %c0_21] : memref<2x32x1xf32, #tpu.memory_space<vmem>>, vector<1x32x1xf32>
    %30 = vector.shape_cast %29 : vector<1x32x1xf32> to vector<32x1xf32>
    %31 = arith.truncf %26 : vector<32x128xf32> to vector<32x128xbf16>
    %cst_22 = arith.constant dense<0.000000e+00> : vector<32x128xf32>
    %32 = tpu.matmul %28, %31, %cst_22 {dimension_numbers = #tpu.dot_dimension_numbers<[1], [0], [0], [1], [0, 0, 1, 1], [], []>} : vector<32x32xbf16>, vector<32x128xbf16>, vector<32x128xf32> -> vector<32x128xf32>
    %33 = vector.broadcast %30 : vector<32x1xf32> to vector<32x128xf32>
    %34 = arith.addf %32, %33 : vector<32x128xf32>
    %35 = math.tanh %34 : vector<32x128xf32>
    %36 = arith.truncf %35 : vector<32x128xf32> to vector<32x128xbf16>
    %cst_23 = arith.constant dense<0.000000e+00> : vector<1x128xf32>
    %37 = tpu.matmul %3, %36, %cst_23 {dimension_numbers = #tpu.dot_dimension_numbers<[1], [0], [0], [1], [0, 0, 1, 1], [], []>} : vector<1x32xbf16>, vector<32x128xbf16>, vector<1x128xf32> -> vector<1x128xf32>
    %38 = vector.broadcast %4 : vector<1x1xf32> to vector<1x128xf32>
    %39 = arith.addf %37, %38 : vector<1x128xf32>
    %c0_24 = arith.constant 0 : index
    %c0_25 = arith.constant 0 : index
    %40 = vector.load %arg8[%c0_24, %c0_25] : memref<1x128xf32, #tpu.memory_space<vmem>>, vector<1x128xf32>
    tpu.vector_store %arg8[%c0_24, %c0_25], %39 {strides = array<i32>} : memref<1x128xf32, #tpu.memory_space<vmem>>, vector<1x128xf32>,
    return
  }
  func.func @transform_0(%arg0: i32) -> (i32, i32) {
    %c0_i32 = arith.constant 0 : i32
    %c0_i32_0 = arith.constant 0 : i32
    return %c0_i32, %arg0 : i32, i32
  }
  func.func @transform_1(%arg0: i32) -> (i32, i32) {
    %c0_i32 = arith.constant 0 : i32
    %c0_i32_0 = arith.constant 0 : i32
    %c0_i32_1 = arith.constant 0 : i32
    return %c0_i32, %c0_i32_0 : i32, i32
  }
  func.func @transform_2(%arg0: i32) -> (i32, i32) {
    %c0_i32 = arith.constant 0 : i32
    %c0_i32_0 = arith.constant 0 : i32
    %c0_i32_1 = arith.constant 0 : i32
    return %c0_i32, %c0_i32_0 : i32, i32
  }
  func.func @transform_3(%arg0: i32) -> (i32, i32, i32) {
    %c0_i32 = arith.constant 0 : i32
    %c0_i32_0 = arith.constant 0 : i32
    %c0_i32_1 = arith.constant 0 : i32
    %c0_i32_2 = arith.constant 0 : i32
    return %c0_i32, %c0_i32_0, %c0_i32_1 : i32, i32, i32
  }
  func.func @transform_4(%arg0: i32) -> (i32, i32, i32) {
    %c0_i32 = arith.constant 0 : i32
    %c0_i32_0 = arith.constant 0 : i32
    %c0_i32_1 = arith.constant 0 : i32
    %c0_i32_2 = arith.constant 0 : i32
    return %c0_i32, %c0_i32_0, %c0_i32_1 : i32, i32, i32
  }
  func.func @transform_5(%arg0: i32) -> (i32, i32) {
    %c0_i32 = arith.constant 0 : i32
    %c0_i32_0 = arith.constant 0 : i32
    %c0_i32_1 = arith.constant 0 : i32
    return %c0_i32, %c0_i32_0 : i32, i32
  }
  func.func @transform_6(%arg0: i32) -> (i32, i32) {
    %c0_i32 = arith.constant 0 : i32
    %c0_i32_0 = arith.constant 0 : i32
    %c0_i32_1 = arith.constant 0 : i32
    return %c0_i32, %c0_i32_0 : i32, i32
  }
  func.func @transform_7(%arg0: i32) -> (i32, i32) {
    %c0_i32 = arith.constant 0 : i32
    %c0_i32_0 = arith.constant 0 : i32
    return %c0_i32, %arg0 : i32, i32
  }
}

</mosaic_0001>

<llo_original>
// kernel: tpu_custom_call.1
$region0: #{tpu_custom_call.1}
  #allocation0 [shape = 'u32[]', space=smem, size = 0x4, offset = 0x4, fixed_abs, tag = 'smem constant byte address 0x4 - core index']
  #allocation1 [shape = 'u32[144,128]{1,0:T(1,128)}', space=vmem, size = 0x12000, scoped, tag = 'internal scratch']
  #allocation2 [shape = 'f32[1,1]{1,0:T(1,128)S(1)}', space=vmem, size = 0x200, scoped, tag = 'scoped memory for tpu_custom_call.1']
  %s0 = inlined_call_operand.vmem [shape: f32[2,128], index: 0, kind: input, shape index: {}]
  %s1 = inlined_call_operand.vmem [shape: f32[32,2], index: 1, kind: input, shape index: {}]
  %s2 = inlined_call_operand.vmem [shape: f32[32,1], index: 2, kind: input, shape index: {}]
  %s3 = inlined_call_operand.vmem [shape: bf16[2,32,32], index: 3, kind: input, shape index: {}]
  %s4 = inlined_call_operand.vmem [shape: f32[2,32,1], index: 4, kind: input, shape index: {}]
  %s5 = inlined_call_operand.vmem [shape: bf16[1,32], index: 5, kind: input, shape index: {}]
  %s6 = inlined_call_operand.<no memory space> [shape: f32[1,1], index: 6, kind: input, shape index: {}]
  %s7 = inlined_call_operand.hbm [shape: f32[1,128], index: 7, kind: output, shape index: {}]
  %s8 = sld [smem:[#allocation0]]
  $region38: #{tpu_custom_call.1} parent=0
    _
  %s10 = ssub.s32 1, %s8
  %s11 = scalar_select 0, %s10, %s8
  %v12 = vstv %s6
  %13 = vst [vmem:[#allocation2] sm:$0x1] %v12
  $region1: #{tpu_custom_call.1} parent=0
    #allocation3 [shape = 'u8[512]{0}', space=vmem, size = 0x400, scoped, tag = 'output window, operand 0, single buffered']
    #allocation4 [shape = 's32[1]{0}', space=sflag, size = 0x4, scoped, tag = 'scoped memory for tpu_custom_call.1']
    %14 = vsyncpa [#allocation4], 0
    // Predicated region
    $region2: #{tpu_custom_call.1} parent=1 // pred_check
      _
    $region3: #{tpu_custom_call.1} parent=1 // pred_check_branch
      %16 = sbr.rel (0) target = $region5
    $region4: #{tpu_custom_call.1} parent=1 // pred_region
      _
    $region5: #{tpu_custom_call.1} parent=1 // pred_fallthru
      _
    // Predicated region
    $region6: #{tpu_custom_call.1} parent=1 // pred_check
      _
    $region7: #{tpu_custom_call.1} parent=1 // pred_check_branch
      %18 = sbr.rel (0) target = $region9
    $region8: #{tpu_custom_call.1} parent=1 // pred_region
      _
    $region9: #{tpu_custom_call.1} parent=1 // pred_fallthru
      _
    // Predicated region
    $region10: #{tpu_custom_call.1} parent=1 // pred_check
      _
    $region11: #{tpu_custom_call.1} parent=1 // pred_check_branch
      %20 = sbr.rel (0) target = $region13
    $region12: #{tpu_custom_call.1} parent=1 // pred_region
      _
    $region13: #{tpu_custom_call.1} parent=1 // pred_fallthru
      _
    // Predicated region
    $region14: #{tpu_custom_call.1} parent=1 // pred_check
      _
    $region15: #{tpu_custom_call.1} parent=1 // pred_check_branch
      %22 = sbr.rel (0) target = $region17
    $region16: #{tpu_custom_call.1} parent=1 // pred_region
      _
    $region17: #{tpu_custom_call.1} parent=1 // pred_fallthru
      _
    // Predicated region
    $region18: #{tpu_custom_call.1} parent=1 // pred_check
      _
    $region19: #{tpu_custom_call.1} parent=1 // pred_check_branch
      %24 = sbr.rel (0) target = $region21
    $region20: #{tpu_custom_call.1} parent=1 // pred_region
      _
    $region21: #{tpu_custom_call.1} parent=1 // pred_fallthru
      _
    // Predicated region
    $region22: #{tpu_custom_call.1} parent=1 // pred_check
      _
    $region23: #{tpu_custom_call.1} parent=1 // pred_check_branch
      %26 = sbr.rel (0) target = $region25
    $region24: #{tpu_custom_call.1} parent=1 // pred_region
      _
    $region25: #{tpu_custom_call.1} parent=1 // pred_fallthru
      _
    // Predicated region
    $region26: #{tpu_custom_call.1} parent=1 // pred_check
      _
    $region27: #{tpu_custom_call.1} parent=1 // pred_check_branch
      %28 = sbr.rel (0) target = $region29
    $region28: #{tpu_custom_call.1} parent=1 // pred_region
      _
    $region29: #{tpu_custom_call.1} parent=1 // pred_fallthru
      _
    %v30 = vld [vmem:[%s1] sm:$0xff]
    %v31 = vld [vmem:[%s1 + $0x8] sm:$0xff]
    %v32 = vld [vmem:[%s1 + $0x10] sm:$0xff]
    %v33 = vld [vmem:[%s1 + $0x18] sm:$0xff]
    %v34 = vld [vmem:[%s2] sm:$0xff]
    %v35 = vld [vmem:[%s2 + $0x8] sm:$0xff]
    %v36 = vld [vmem:[%s2 + $0x10] sm:$0xff]
    %v37 = vld [vmem:[%s2 + $0x18] sm:$0xff]
    %v38 = vld [vmem:[%s5] sm:$0x1]
    %v39 = vld [vmem:[#allocation2] sm:$0x1]
    %v40 = vld [vmem:[%s0] sm:$0x3]
    %42 = vset.pattern.permute.xlu0 0
    %43 = vperm.xlu0 %42, %v30
    %v44 = vpop.permute.xlu0 %43
    %47 = vset.pattern.permute.xlu0 0
    %48 = vperm.xlu0 %47, %v31
    %v49 = vpop.permute.xlu0 %48
    %52 = vset.pattern.permute.xlu0 0
    %53 = vperm.xlu0 %52, %v32
    %v54 = vpop.permute.xlu0 %53
    %57 = vset.pattern.permute.xlu0 0
    %58 = vperm.xlu0 %57, %v33
    %v59 = vpop.permute.xlu0 %58
    %v61 = vlaneseq
    %v62 = vshrl.u32 %v61, 7
    %v63 = vsub.s32 0, %v62
    %v64 = vrot.slane %v40, %v63
    %v65 = vmul.f32 %v44, %v64
    %v66 = vmul.f32 %v49, %v64
    %v67 = vmul.f32 %v54, %v64
    %v68 = vmul.f32 %v59, %v64
    %69 = vset.pattern.permute.xlu0 1
    %70 = vperm.xlu0 %69, %v30
    %v71 = vpop.permute.xlu0 %70
    %73 = vset.pattern.permute.xlu0 1
    %74 = vperm.xlu0 %73, %v31
    %v75 = vpop.permute.xlu0 %74
    %77 = vset.pattern.permute.xlu0 1
    %78 = vperm.xlu0 %77, %v32
    %v79 = vpop.permute.xlu0 %78
    %81 = vset.pattern.permute.xlu0 1
    %82 = vperm.xlu0 %81, %v33
    %v83 = vpop.permute.xlu0 %82
    %v85 = vlaneseq
    %v86 = vshrl.u32 %v85, 7
    %v87 = vsub.s32 1, %v86
    %v88 = vrot.slane %v40, %v87
    %v89 = vmul.f32 %v71, %v88
    %v90 = vmul.f32 %v75, %v88
    %v91 = vmul.f32 %v79, %v88
    %v92 = vmul.f32 %v83, %v88
    %v93 = vadd.f32 %v65, %v89
    %v94 = vadd.f32 %v66, %v90
    %v95 = vadd.f32 %v67, %v91
    %v96 = vadd.f32 %v68, %v92
    %98 = vset.pattern.permute.xlu0 0
    %99 = vperm.xlu0 %98, %v34
    %v100 = vpop.permute.xlu0 %99
    %103 = vset.pattern.permute.xlu0 0
    %104 = vperm.xlu0 %103, %v35
    %v105 = vpop.permute.xlu0 %104
    %108 = vset.pattern.permute.xlu0 0
    %109 = vperm.xlu0 %108, %v36
    %v110 = vpop.permute.xlu0 %109
    %113 = vset.pattern.permute.xlu0 0
    %114 = vperm.xlu0 %113, %v37
    %v115 = vpop.permute.xlu0 %114
    %v117 = vadd.f32 %v93, %v100
    %v118 = vadd.f32 %v94, %v105
    %v119 = vadd.f32 %v95, %v110
    %v120 = vadd.f32 %v96, %v115
    %v121 = vtanh.pop %v117
    %v122 = vtanh.pop %v118
    %v123 = vtanh.pop %v119
    %v124 = vtanh.pop %v120
    %v125 = vld [vmem:[%s3] sm:$0xf]
    %v126 = vld [vmem:[%s3 + $0x4] sm:$0xf]
    %v127 = vld [vmem:[%s3 + $0x8] sm:$0xf]
    %v128 = vld [vmem:[%s3 + $0xc] sm:$0xf]
    %v129 = vld [vmem:[%s4] sm:$0xff]
    %v130 = vld [vmem:[%s4 + $0x8] sm:$0xff]
    %v131 = vld [vmem:[%s4 + $0x10] sm:$0xff]
    %v132 = vld [vmem:[%s4 + $0x18] sm:$0xff]
    %v133 = vpack.c.bf16 %v122, %v121
    %v134 = vpack.c.bf16 %v124, %v123
    %136 = vset.pattern.permute.xlu0 0
    %137 = vperm.xlu0 %136, %v129
    %v138 = vpop.permute.xlu0 %137
    %141 = vset.pattern.permute.xlu0 0
    %142 = vperm.xlu0 %141, %v130
    %v143 = vpop.permute.xlu0 %142
    %146 = vset.pattern.permute.xlu0 0
    %147 = vperm.xlu0 %146, %v131
    %v148 = vpop.permute.xlu0 %147
    %151 = vset.pattern.permute.xlu0 0
    %152 = vperm.xlu0 %151, %v132
    %v153 = vpop.permute.xlu0 %152
    %v159 = vunpack.c.l.b16 %v125
    %v160 = vunpack.c.l.b16 %v126
    %v161 = vunpack.c.l.b16 %v127
    %v162 = vunpack.c.l.b16 %v128
    %v163 = vpack.c.b16 %v160, %v159
    %v164 = vpack.c.b16 %v162, %v161
    %vm165 = vcmask 261120
    %v167 = vsel %vm165, %v163, 0
    %v170 = vsel %vm165, %v164, 0
    %172 = vmatprep.subr.bf16.mxu0 0
    %173 = vmatpush1.bf16.msra.mxu0 %v133
    %174 = vmatprep.subr.bf16.mxu0 0
    %175 = vmatpush1.bf16.msra.mxu0 %v134
    %176 = vmatprep.subr.bf16.mxu0 0
    %177 = vmatpush1.bf16.msra.mxu0 0
    %178 = vmatprep.subr.bf16.mxu0 0
    %179 = vmatpush1.bf16.msra.mxu0 0
    %180 = vmatprep.subr.bf16.mxu0 0
    %181 = vmatpush1.bf16.msra.mxu0 0
    %182 = vmatprep.subr.bf16.mxu0 0
    %183 = vmatpush1.bf16.msra.mxu0 0
    %184 = vmatprep.subr.bf16.mxu0 0
    %185 = vmatpush1.bf16.msra.mxu0 0
    %186 = vmatprep.subr.bf16.mxu0 0
    %187 = vmatpush1.bf16.msra.mxu0 0
    %188 = vmatprep.subr.bf16.mxu0 0
    %189 = vmatpush1.bf16.msra.mxu0 0
    %190 = vmatprep.subr.bf16.mxu0 0
    %191 = vmatpush1.bf16.msra.mxu0 0
    %192 = vmatprep.subr.bf16.mxu0 0
    %193 = vmatpush1.bf16.msra.mxu0 0
    %194 = vmatprep.subr.bf16.mxu0 0
    %195 = vmatpush1.bf16.msra.mxu0 0
    %196 = vmatprep.subr.bf16.mxu0 0
    %197 = vmatpush1.bf16.msra.mxu0 0
    %198 = vmatprep.subr.bf16.mxu0 0
    %199 = vmatpush1.bf16.msra.mxu0 0
    %200 = vmatprep.subr.bf16.mxu0 0
    %201 = vmatpush1.bf16.msra.mxu0 0
    %202 = vmatprep.subr.bf16.mxu0 0
    %203 = vmatpush1.bf16.msra.mxu0 0
    %204 = vmatprep.mubr.bf16.mxu0 0
    %205 = vmatmul.mubr.bf16.gmra.mrb[0].mxu0 %v167
    %v206 = vpop.f32.mrb[0].mxu0
    %v207 = vadd.f32 %v138, %v206
    %v208 = vpop.f32.mrb[0].mxu0
    %v209 = vpop.f32.mrb[0].mxu0
    %v210 = vadd.f32 %v143, %v209
    %v211 = vpop.f32.mrb[0].mxu0
    %212 = vmatprep.mubr.bf16.mxu0 0
    %213 = vmatmul.mubr.bf16.gmra.mrb[0].mxu0 %v170
    %v214 = vpop.f32.mrb[0].mxu0
    %v215 = vadd.f32 %v148, %v214
    %v216 = vpop.f32.mrb[0].mxu0
    %v217 = vpop.f32.mrb[0].mxu0
    %v218 = vadd.f32 %v153, %v217
    %v219 = vpop.f32.mrb[0].mxu0
    %220 = vdwg.mxu0
    %v221 = vtanh.pop %v207
    %v222 = vtanh.pop %v210
    %v223 = vtanh.pop %v215
    %v224 = vtanh.pop %v218
    %s225 = scalar_lea.vmem %s3, 16
    %v226 = vld [vmem:[%s225] sm:$0xf]
    %v227 = vld [vmem:[%s225 + $0x4] sm:$0xf]
    %v228 = vld [vmem:[%s225 + $0x8] sm:$0xf]
    %v229 = vld [vmem:[%s225 + $0xc] sm:$0xf]
    %s230 = scalar_lea.vmem %s4, 32
    %v231 = vld [vmem:[%s230] sm:$0xff]
    %v232 = vld [vmem:[%s230 + $0x8] sm:$0xff]
    %v233 = vld [vmem:[%s230 + $0x10] sm:$0xff]
    %v234 = vld [vmem:[%s230 + $0x18] sm:$0xff]
    %v235 = vpack.c.bf16 %v222, %v221
    %v236 = vpack.c.bf16 %v224, %v223
    %238 = vset.pattern.permute.xlu0 0
    %239 = vperm.xlu0 %238, %v231
    %v240 = vpop.permute.xlu0 %239
    %243 = vset.pattern.permute.xlu0 0
    %244 = vperm.xlu0 %243, %v232
    %v245 = vpop.permute.xlu0 %244
    %248 = vset.pattern.permute.xlu0 0
    %249 = vperm.xlu0 %248, %v233
    %v250 = vpop.permute.xlu0 %249
    %253 = vset.pattern.permute.xlu0 0
    %254 = vperm.xlu0 %253, %v234
    %v255 = vpop.permute.xlu0 %254
    %v261 = vunpack.c.l.b16 %v226
    %v262 = vunpack.c.l.b16 %v227
    %v263 = vunpack.c.l.b16 %v228
    %v264 = vunpack.c.l.b16 %v229
    %v265 = vpack.c.b16 %v262, %v261
    %v266 = vpack.c.b16 %v264, %v263
    %v268 = vsel %vm165, %v265, 0
    %v271 = vsel %vm165, %v266, 0
    %273 = vmatprep.subr.bf16.mxu0 0
    %274 = vmatpush1.bf16.msra.mxu0 %v235
    %275 = vmatprep.subr.bf16.mxu0 0
    %276 = vmatpush1.bf16.msra.mxu0 %v236
    %277 = vmatprep.subr.bf16.mxu0 0
    %278 = vmatpush1.bf16.msra.mxu0 0
    %279 = vmatprep.subr.bf16.mxu0 0
    %280 = vmatpush1.bf16.msra.mxu0 0
    %281 = vmatprep.subr.bf16.mxu0 0
    %282 = vmatpush1.bf16.msra.mxu0 0
    %283 = vmatprep.subr.bf16.mxu0 0
    %284 = vmatpush1.bf16.msra.mxu0 0
    %285 = vmatprep.subr.bf16.mxu0 0
    %286 = vmatpush1.bf16.msra.mxu0 0
    %287 = vmatprep.subr.bf16.mxu0 0
    %288 = vmatpush1.bf16.msra.mxu0 0
    %289 = vmatprep.subr.bf16.mxu0 0
    %290 = vmatpush1.bf16.msra.mxu0 0
    %291 = vmatprep.subr.bf16.mxu0 0
    %292 = vmatpush1.bf16.msra.mxu0 0
    %293 = vmatprep.subr.bf16.mxu0 0
    %294 = vmatpush1.bf16.msra.mxu0 0
    %295 = vmatprep.subr.bf16.mxu0 0
    %296 = vmatpush1.bf16.msra.mxu0 0
    %297 = vmatprep.subr.bf16.mxu0 0
    %298 = vmatpush1.bf16.msra.mxu0 0
    %299 = vmatprep.subr.bf16.mxu0 0
    %300 = vmatpush1.bf16.msra.mxu0 0
    %301 = vmatprep.subr.bf16.mxu0 0
    %302 = vmatpush1.bf16.msra.mxu0 0
    %303 = vmatprep.subr.bf16.mxu0 0
    %304 = vmatpush1.bf16.msra.mxu0 0
    %305 = vmatprep.mubr.bf16.mxu0 0
    %306 = vmatmul.mubr.bf16.gmra.mrb[0].mxu0 %v268
    %v307 = vpop.f32.mrb[0].mxu0
    %v308 = vadd.f32 %v240, %v307
    %v309 = vpop.f32.mrb[0].mxu0
    %v310 = vpop.f32.mrb[0].mxu0
    %v311 = vadd.f32 %v245, %v310
    %v312 = vpop.f32.mrb[0].mxu0
    %313 = vmatprep.mubr.bf16.mxu0 0
    %314 = vmatmul.mubr.bf16.gmra.mrb[0].mxu0 %v271
    %v315 = vpop.f32.mrb[0].mxu0
    %v316 = vadd.f32 %v250, %v315
    %v317 = vpop.f32.mrb[0].mxu0
    %v318 = vpop.f32.mrb[0].mxu0
    %v319 = vadd.f32 %v255, %v318
    %v320 = vpop.f32.mrb[0].mxu0
    %321 = vdwg.mxu0
    %v322 = vtanh.pop %v308
    %v323 = vtanh.pop %v311
    %v324 = vtanh.pop %v316
    %v325 = vtanh.pop %v319
    %v326 = vpack.c.bf16 %v323, %v322
    %v327 = vpack.c.bf16 %v325, %v324
    %329 = vset.pattern.permute.xlu0 0
    %330 = vperm.xlu0 %329, %v39
    %v331 = vpop.permute.xlu0 %330
    %v333 = vlaneseq
    %v334 = vshrl.u32 %v333, 7
    %v335 = vsub.s32 0, %v334
    %v336 = vrot.slane %v331, %v335
    %v338 = vsel %vm165, %v38, 0
    %340 = vmatprep.subr.bf16.mxu0 0
    %341 = vmatpush1.bf16.msra.mxu0 %v326
    %342 = vmatprep.subr.bf16.mxu0 0
    %343 = vmatpush1.bf16.msra.mxu0 %v327
    %344 = vmatprep.subr.bf16.mxu0 0
    %345 = vmatpush1.bf16.msra.mxu0 0
    %346 = vmatprep.subr.bf16.mxu0 0
    %347 = vmatpush1.bf16.msra.mxu0 0
    %348 = vmatprep.subr.bf16.mxu0 0
    %349 = vmatpush1.bf16.msra.mxu0 0
    %350 = vmatprep.subr.bf16.mxu0 0
    %351 = vmatpush1.bf16.msra.mxu0 0
    %352 = vmatprep.subr.bf16.mxu0 0
    %353 = vmatpush1.bf16.msra.mxu0 0
    %354 = vmatprep.subr.bf16.mxu0 0
    %355 = vmatpush1.bf16.msra.mxu0 0
    %356 = vmatprep.subr.bf16.mxu0 0
    %357 = vmatpush1.bf16.msra.mxu0 0
    %358 = vmatprep.subr.bf16.mxu0 0
    %359 = vmatpush1.bf16.msra.mxu0 0
    %360 = vmatprep.subr.bf16.mxu0 0
    %361 = vmatpush1.bf16.msra.mxu0 0
    %362 = vmatprep.subr.bf16.mxu0 0
    %363 = vmatpush1.bf16.msra.mxu0 0
    %364 = vmatprep.subr.bf16.mxu0 0
    %365 = vmatpush1.bf16.msra.mxu0 0
    %366 = vmatprep.subr.bf16.mxu0 0
    %367 = vmatpush1.bf16.msra.mxu0 0
    %368 = vmatprep.subr.bf16.mxu0 0
    %369 = vmatpush1.bf16.msra.mxu0 0
    %370 = vmatprep.subr.bf16.mxu0 0
    %371 = vmatpush1.bf16.msra.mxu0 0
    %372 = vmatprep.mubr.bf16.mxu0 0
    %373 = vmatmul.mubr.bf16.gmra.mrb[0].mxu0 %v338
    %v374 = vpop.f32.mrb[0].mxu0
    %v375 = vadd.f32 %v336, %v374
    %v376 = vpop.f32.mrb[0].mxu0
    %v377 = vpop.f32.mrb[0].mxu0
    %v378 = vpop.f32.mrb[0].mxu0
    %379 = vdwg.mxu0
    %380 = vst [vmem:[#allocation3] sm:$0x1] %v375
    // Predicated region
    $region30: #{tpu_custom_call.1} parent=1 // pred_check
      _
    $region31: #{tpu_custom_call.1} parent=1 // pred_check_branch
      %382 = sbr.rel (0) target = $region33
    $region32: #{tpu_custom_call.1} parent=1 // pred_region
      %s384 = ssub.s32 16, 16
      %385 = vsyncadd [#allocation4], %s384
      %s387 = sshll.u32 [#allocation3], 4
      %s388 = int_to_ptr.vmem [resolvable:$true] %s387
      %390 = dma.vmem_to_hbm [thread:$0]  %s388, 16, %s7, [#allocation4]
    $region33: #{tpu_custom_call.1} parent=1 // pred_fallthru
      _
    // Predicated region
    $region34: #{tpu_custom_call.1} parent=1 // pred_check
      _
    $region35: #{tpu_custom_call.1} parent=1 // pred_check_branch
      %392 = sbr.rel (0) target = $region37
    $region36: #{tpu_custom_call.1} parent=1 // pred_region
      %393 = dma.done [#allocation4], 16
    $region37: #{tpu_custom_call.1} parent=1 // pred_fallthru
      _
    %394 = vsyncpa [#allocation4], 1

</llo_original>
